<compile_context>
chip_gen: v7x
topology: tpu7x:2x2x1
jax: 0.10.0
libtpu: 0.0.40
codegen_flags: <defaults>
</compile_context>

<pallas_src>
import jax
import jax.numpy as jnp
from jax.experimental import pallas as pl
from jax.experimental.pallas import tpu as pltpu

LANES = 1024                           # 8 * 128 -> lane-dense, unmasked vst
TARGET_BLOCK_BYTES = 8 * 1024 * 1024   # ~8 MiB per grid step
VMEM_LIMIT_BYTES = 48 * 1024 * 1024    # 2x(in+out) 8 MiB buffers + headroom, < v7x 64 MiB
MIN_GRID_STEPS = 4                     # >= 2 blocks per core on v7x; enables pipelining


def _round_up(x: int, m: int) -> int:
    return -(-x // m) * m


def _make_linear_s_kernel(foot: float, inv_denom: float):
    foot = float(foot)
    inv_denom = float(inv_denom)

    def kernel(x_ref, o_ref):
        # (x - foot) * (1/denom), clamped to [0, 1]; math in f32 for parity
        # with torch's float parameters.  Pure VALU work, no divide/EUP.
        y = (x_ref[...].astype(jnp.float32) - foot) * inv_denom
        y = jnp.minimum(jnp.maximum(y, 0.0), 1.0)
        o_ref[...] = y.astype(o_ref.dtype)

    return kernel


def linear_s(x: jax.Array, foot: float, shoulder: float) -> jax.Array:
    """Applies the Linear-S membership function elementwise via Pallas."""
    denom = float(shoulder) - float(foot)
    if denom == 0.0:
        raise ValueError("LinearS requires shoulder != foot")

    orig_shape = x.shape
    # torch promotes integer inputs to float through the float parameters.
    if not jnp.issubdtype(x.dtype, jnp.floating):
        x = x.astype(jnp.float32)
    dtype = x.dtype
    itemsize = jnp.dtype(dtype).itemsize
    total = int(x.size)

    if total == 0:
        return jnp.zeros(orig_shape, dtype)

    # --- tiling --------------------------------------------------------------
    # sublane quantum: 8 rows for f32, 16 for bf16, 32 for int8 (packed dtypes)
    row_quantum = max(8, 32 // itemsize)
    rows = pl.cdiv(total, LANES)

    if rows <= row_quantum:
        # Tiny input: a single full-extent block (block dim == array dim is legal).
        block_rows = rows
    else:
        block_rows_target = max(
            row_quantum,
            (TARGET_BLOCK_BYTES // (LANES * itemsize)) // row_quantum * row_quantum,
        )
        # Cap block size so the grid has >= MIN_GRID_STEPS steps: DMA/compute
        # overlap plus enough blocks for both v7x TensorCores.
        cap = _round_up(pl.cdiv(rows, MIN_GRID_STEPS), row_quantum)
        block_rows = max(row_quantum, min(block_rows_target, cap))
    grid_steps = pl.cdiv(rows, block_rows)

    # --- lane-dense 2D view; pad only up to the next LANES multiple ----------
    padded_total = rows * LANES
    x_flat = x.reshape(-1)
    if padded_total != total:
        # Ragged tail (< LANES elements).  TODO(synk): fold this pad (and the
        # final slice) into the pallas_call (allow_input_fusion / epilogue
        # kernel) to avoid the extra HBM round-trip on ragged sizes.
        x_flat = jnp.pad(x_flat, (0, padded_total - total))
    x2d = x_flat.reshape(rows, LANES)

    kernel = _make_linear_s_kernel(foot, 1.0 / denom)
    block_spec = pl.BlockSpec((block_rows, LANES), lambda i: (i, 0))

    def run(dim_semantics):
        return pl.pallas_call(
            kernel,
            out_shape=jax.ShapeDtypeStruct((rows, LANES), dtype),
            grid_spec=pl.GridSpec(
                grid=(grid_steps,),
                in_specs=[block_spec],
                out_specs=block_spec,
            ),
            compiler_params=pltpu.CompilerParams(
                dimension_semantics=dim_semantics,
                vmem_limit_bytes=VMEM_LIMIT_BYTES,
            ),
        )(x2d)

    try:
        # core_parallel actually splits the grid across TensorCores (2 on v7x);
        # single-core chips simply run the whole grid on core 0.
        out2d = run((pltpu.CORE_PARALLEL,))
    except Exception:
        # Conservative fallback for parts/runtimes that reject core_parallel
        # (e.g. a grid that cannot be split across cores).
        out2d = run(("parallel",))

    out_flat = out2d.reshape(-1)
    if padded_total != total:
        out_flat = out_flat[:total]
    return out_flat.reshape(orig_shape)


if __name__ == "__main__":
    # deterministic "parameters" (module __init__ would wrap these as scalar
    # tensors via init_parameter)
    FOOT = 0.2
    SHOULDER = 0.8

    key = jax.random.PRNGKey(0)
    x = jax.random.normal(key, (2, 4, 16, 16), dtype=jnp.float32)

    out = jax.block_until_ready(linear_s(x, FOOT, SHOULDER))
    ref = jnp.clip((x - FOOT) / (SHOULDER - FOOT), 0.0, 1.0)
    assert out.shape == x.shape and out.dtype == x.dtype
    assert jnp.allclose(out, ref, atol=1e-5, rtol=1e-5), "mismatch vs reference"

    # ragged size (not a multiple of 1024 elements) exercises the pad/slice path
    x2 = jax.random.normal(jax.random.PRNGKey(0), (3, 5, 7), dtype=jnp.float32)
    out2 = jax.block_until_ready(linear_s(x2, FOOT, SHOULDER))
    ref2 = jnp.clip((x2 - FOOT) / (SHOULDER - FOOT), 0.0, 1.0)
    assert out2.shape == x2.shape and out2.dtype == x2.dtype
    assert jnp.allclose(out2, ref2, atol=1e-5, rtol=1e-5), "mismatch (ragged path)"

    print("KERNEL_OK")
</pallas_src>

<mosaic_0001>
module attributes {stable_mosaic.version = 11 : i64} {
  func.func @kernel(%arg0: i32, %arg1: memref<2x1024xf32, #tpu.memory_space<vmem>>, %arg2: memref<2x1024xf32, #tpu.memory_space<vmem>>) attributes {dimension_semantics = [#tpu.dimension_semantics<core_parallel>], iteration_bounds = array<i64: 1>, scalar_prefetch = 0 : i64, scratch_operands = 0 : i64, tpu.core_type = #tpu.core_type<tc>, window_params = [{transform_indices = @transform_0, window_bounds = array<i64: 2, 1024>}, {transform_indices = @transform_1, window_bounds = array<i64: 2, 1024>}]} {
    %c0 = arith.constant 0 : index
    %c0_0 = arith.constant 0 : index
    %0 = vector.load %arg1[%c0, %c0_0] : memref<2x1024xf32, #tpu.memory_space<vmem>>, vector<2x1024xf32>
    %cst = arith.constant 2.000000e-01 : f32
    %1 = vector.broadcast %cst : f32 to vector<2x1024xf32>
    %2 = arith.subf %0, %1 : vector<2x1024xf32>
    %cst_1 = arith.constant 1.66666663 : f32
    %3 = vector.broadcast %cst_1 : f32 to vector<2x1024xf32>
    %4 = arith.mulf %2, %3 : vector<2x1024xf32>
    %cst_2 = arith.constant 0.000000e+00 : f32
    %5 = vector.broadcast %cst_2 : f32 to vector<2x1024xf32>
    %6 = arith.maximumf %4, %5 : vector<2x1024xf32>
    %cst_3 = arith.constant 1.000000e+00 : f32
    %7 = vector.broadcast %cst_3 : f32 to vector<2x1024xf32>
    %8 = arith.minimumf %6, %7 : vector<2x1024xf32>
    %c0_4 = arith.constant 0 : index
    %c0_5 = arith.constant 0 : index
    %9 = vector.load %arg2[%c0_4, %c0_5] : memref<2x1024xf32, #tpu.memory_space<vmem>>, vector<2x1024xf32>
    tpu.vector_store %arg2[%c0_4, %c0_5], %8 {strides = array<i32>} : memref<2x1024xf32, #tpu.memory_space<vmem>>, vector<2x1024xf32>,
    return
  }
  func.func @transform_0(%arg0: i32) -> (i32, i32) {
    %c0_i32 = arith.constant 0 : i32
    %c0_i32_0 = arith.constant 0 : i32
    return %arg0, %c0_i32 : i32, i32
  }
  func.func @transform_1(%arg0: i32) -> (i32, i32) {
    %c0_i32 = arith.constant 0 : i32
    %c0_i32_0 = arith.constant 0 : i32
    return %arg0, %c0_i32 : i32, i32
  }
}

module attributes {stable_mosaic.version = 11 : i64} {
  func.func @kernel(%arg0: i32, %arg1: memref<2x1024xf32, #tpu.memory_space<vmem>>, %arg2: memref<2x1024xf32, #tpu.memory_space<vmem>>) attributes {dimension_semantics = [#tpu.dimension_semantics<parallel>], iteration_bounds = array<i64: 1>, scalar_prefetch = 0 : i64, scratch_operands = 0 : i64, tpu.core_type = #tpu.core_type<tc>, window_params = [{transform_indices = @transform_0, window_bounds = array<i64: 2, 1024>}, {transform_indices = @transform_1, window_bounds = array<i64: 2, 1024>}]} {
    %c0 = arith.constant 0 : index
    %c0_0 = arith.constant 0 : index
    %0 = vector.load %arg1[%c0, %c0_0] : memref<2x1024xf32, #tpu.memory_space<vmem>>, vector<2x1024xf32>
    %cst = arith.constant 2.000000e-01 : f32
    %1 = vector.broadcast %cst : f32 to vector<2x1024xf32>
    %2 = arith.subf %0, %1 : vector<2x1024xf32>
    %cst_1 = arith.constant 1.66666663 : f32
    %3 = vector.broadcast %cst_1 : f32 to vector<2x1024xf32>
    %4 = arith.mulf %2, %3 : vector<2x1024xf32>
    %cst_2 = arith.constant 0.000000e+00 : f32
    %5 = vector.broadcast %cst_2 : f32 to vector<2x1024xf32>
    %6 = arith.maximumf %4, %5 : vector<2x1024xf32>
    %cst_3 = arith.constant 1.000000e+00 : f32
    %7 = vector.broadcast %cst_3 : f32 to vector<2x1024xf32>
    %8 = arith.minimumf %6, %7 : vector<2x1024xf32>
    %c0_4 = arith.constant 0 : index
    %c0_5 = arith.constant 0 : index
    %9 = vector.load %arg2[%c0_4, %c0_5] : memref<2x1024xf32, #tpu.memory_space<vmem>>, vector<2x1024xf32>
    tpu.vector_store %arg2[%c0_4, %c0_5], %8 {strides = array<i32>} : memref<2x1024xf32, #tpu.memory_space<vmem>>, vector<2x1024xf32>,
    return
  }
  func.func @transform_0(%arg0: i32) -> (i32, i32) {
    %c0_i32 = arith.constant 0 : i32
    %c0_i32_0 = arith.constant 0 : i32
    return %arg0, %c0_i32 : i32, i32
  }
  func.func @transform_1(%arg0: i32) -> (i32, i32) {
    %c0_i32 = arith.constant 0 : i32
    %c0_i32_0 = arith.constant 0 : i32
    return %arg0, %c0_i32 : i32, i32
  }
}

</mosaic_0001>

<llo_original>
// kernel: tpu_custom_call.1
$region0: #{tpu_custom_call.1}
  #allocation0 [shape = 'u32[]', space=smem, size = 0x4, offset = 0x4, fixed_abs, tag = 'smem constant byte address 0x4 - core index']
  #allocation1 [shape = 'u32[144,128]{1,0:T(1,128)}', space=vmem, size = 0x12000, scoped, tag = 'internal scratch']
  %s0 = inlined_call_operand.hbm [shape: f32[2,1024], index: 0, kind: input, shape index: {}]
  %s1 = inlined_call_operand.hbm [shape: f32[2,1024], index: 1, kind: output, shape index: {}]
  %s2 = sld [smem:[#allocation0]]
  $region18: #{tpu_custom_call.1} parent=0
    _
  %s4 = ssub.s32 1, %s2
  %s5 = scalar_select 0, %s4, %s2
  $region1: #{tpu_custom_call.1} parent=0
    #allocation2 [shape = 'u8[8192]{0}', space=vmem, size = 0x2000, scoped, tag = 'input window, operand 0, single buffered']
    #allocation3 [shape = 's32[1]{0}', space=sflag, size = 0x4, scoped, tag = 'scoped memory for tpu_custom_call.1']
    #allocation4 [shape = 's32[1]{0}', space=sflag, size = 0x4, scoped, tag = 'scoped memory for tpu_custom_call.1']
    #allocation5 [shape = 'u8[8192]{0}', space=vmem, size = 0x2000, scoped, tag = 'output window, operand 0, single buffered']
    %6 = vsyncpa [#allocation3], 0
    %7 = vsyncpa [#allocation4], 0
    // Predicated region
    $region2: #{tpu_custom_call.1} parent=1 // pred_check
      _
    $region3: #{tpu_custom_call.1} parent=1 // pred_check_branch
      %9 = sbr.rel (0) target = $region5
    $region4: #{tpu_custom_call.1} parent=1 // pred_region
      %s11 = ssub.s32 256, 256
      %12 = vsyncadd [#allocation3], %s11
      %s13 = smul.addr %s5, 8
      %s14 = smul.addr %s13, 32
      %s15 = scalar_lea.hbm %s0, %s14
      %s17 = sshll.u32 [#allocation2], 4
      %s18 = int_to_ptr.vmem [resolvable:$true] %s17
      %20 = dma.hbm_to_vmem [thread:$0]  %s15, 256, %s18, [#allocation3]
    $region5: #{tpu_custom_call.1} parent=1 // pred_fallthru
      _
    // Predicated region
    $region6: #{tpu_custom_call.1} parent=1 // pred_check
      _
    $region7: #{tpu_custom_call.1} parent=1 // pred_check_branch
      %22 = sbr.rel (0) target = $region9
    $region8: #{tpu_custom_call.1} parent=1 // pred_region
      %23 = dma.done [#allocation3], 256
    $region9: #{tpu_custom_call.1} parent=1 // pred_fallthru
      _
    %v24 = vld [vmem:[#allocation2] sm:$0xff]
    %v25 = vld [vmem:[#allocation2 + $0x8] sm:$0xff]
    %v26 = vsub.f32 %v24, 0.2
    %v27 = vsub.f32 %v25, 0.2
    %v28 = vmul.f32 %v26, 1.6666666
    %v29 = vmul.f32 %v27, 1.6666666
    %v30 = vmax.f32 %v28, 0.0
    %v31 = vmax.f32 %v29, 0.0
    %v32 = vmin.f32 %v30, 1.0
    %v33 = vmin.f32 %v31, 1.0
    %34 = vst [vmem:[#allocation5] sm:$0xff] %v32
    %35 = vst [vmem:[#allocation5 + $0x8] sm:$0xff] %v33
    // Predicated region
    $region10: #{tpu_custom_call.1} parent=1 // pred_check
      _
    $region11: #{tpu_custom_call.1} parent=1 // pred_check_branch
      %37 = sbr.rel (0) target = $region13
    $region12: #{tpu_custom_call.1} parent=1 // pred_region
      %s39 = ssub.s32 256, 256
      %40 = vsyncadd [#allocation4], %s39
      %s41 = smul.addr %s5, 8
      %s42 = smul.addr %s41, 32
      %s43 = scalar_lea.hbm %s1, %s42
      %s45 = sshll.u32 [#allocation5], 4
      %s46 = int_to_ptr.vmem [resolvable:$true] %s45
      %48 = dma.vmem_to_hbm [thread:$0]  %s46, 256, %s43, [#allocation4]
    $region13: #{tpu_custom_call.1} parent=1 // pred_fallthru
      _
    // Predicated region
    $region14: #{tpu_custom_call.1} parent=1 // pred_check
      _
    $region15: #{tpu_custom_call.1} parent=1 // pred_check_branch
      %50 = sbr.rel (0) target = $region17
    $region16: #{tpu_custom_call.1} parent=1 // pred_region
      %51 = dma.done [#allocation4], 256
    $region17: #{tpu_custom_call.1} parent=1 // pred_fallthru
      _
    %52 = vsyncpa [#allocation3], 1
    %53 = vsyncpa [#allocation4], 1

// kernel: tpu_custom_call.1
$region0: #{tpu_custom_call.1}
  #allocation0 [shape = 'u32[]', space=smem, size = 0x4, offset = 0x4, fixed_abs, tag = 'smem constant byte address 0x4 - core index']
  #allocation1 [shape = 'u32[144,128]{1,0:T(1,128)}', space=vmem, size = 0x12000, scoped, tag = 'internal scratch']
  %s0 = inlined_call_operand.hbm [shape: f32[2,1024], index: 0, kind: input, shape index: {}]
  %s1 = inlined_call_operand.hbm [shape: f32[2,1024], index: 1, kind: output, shape index: {}]
  %s2 = sld [smem:[#allocation0]]
  $region18: #{tpu_custom_call.1} parent=0
    _
  %s4 = ssub.s32 1, %s2
  %s5 = scalar_select 0, %s4, %s2
  $region1: #{tpu_custom_call.1} parent=0
    #allocation2 [shape = 'u8[8192]{0}', space=vmem, size = 0x2000, scoped, tag = 'input window, operand 0, single buffered']
    #allocation3 [shape = 's32[1]{0}', space=sflag, size = 0x4, scoped, tag = 'scoped memory for tpu_custom_call.1']
    #allocation4 [shape = 's32[1]{0}', space=sflag, size = 0x4, scoped, tag = 'scoped memory for tpu_custom_call.1']
    #allocation5 [shape = 'u8[8192]{0}', space=vmem, size = 0x2000, scoped, tag = 'output window, operand 0, single buffered']
    %6 = vsyncpa [#allocation3], 0
    %7 = vsyncpa [#allocation4], 0
    // Predicated region
    $region2: #{tpu_custom_call.1} parent=1 // pred_check
      _
    $region3: #{tpu_custom_call.1} parent=1 // pred_check_branch
      %9 = sbr.rel (0) target = $region5
    $region4: #{tpu_custom_call.1} parent=1 // pred_region
      %s11 = ssub.s32 256, 256
      %12 = vsyncadd [#allocation3], %s11
      %s14 = sshll.u32 [#allocation2], 4
      %s15 = int_to_ptr.vmem [resolvable:$true] %s14
      %17 = dma.hbm_to_vmem [thread:$0]  %s0, 256, %s15, [#allocation3]
    $region5: #{tpu_custom_call.1} parent=1 // pred_fallthru
      _
    // Predicated region
    $region6: #{tpu_custom_call.1} parent=1 // pred_check
      _
    $region7: #{tpu_custom_call.1} parent=1 // pred_check_branch
      %19 = sbr.rel (0) target = $region9
    $region8: #{tpu_custom_call.1} parent=1 // pred_region
      %20 = dma.done [#allocation3], 256
    $region9: #{tpu_custom_call.1} parent=1 // pred_fallthru
      _
    %v21 = vld [vmem:[#allocation2] sm:$0xff]
    %v22 = vld [vmem:[#allocation2 + $0x8] sm:$0xff]
    %v23 = vsub.f32 %v21, 0.2
    %v24 = vsub.f32 %v22, 0.2
    %v25 = vmul.f32 %v23, 1.6666666
    %v26 = vmul.f32 %v24, 1.6666666
    %v27 = vmax.f32 %v25, 0.0
    %v28 = vmax.f32 %v26, 0.0
    %v29 = vmin.f32 %v27, 1.0
    %v30 = vmin.f32 %v28, 1.0
    %31 = vst [vmem:[#allocation5] sm:$0xff] %v29
    %32 = vst [vmem:[#allocation5 + $0x8] sm:$0xff] %v30
    // Predicated region
    $region10: #{tpu_custom_call.1} parent=1 // pred_check
      _
    $region11: #{tpu_custom_call.1} parent=1 // pred_check_branch
      %34 = sbr.rel (0) target = $region13
    $region12: #{tpu_custom_call.1} parent=1 // pred_region
      %s36 = ssub.s32 256, 256
      %37 = vsyncadd [#allocation4], %s36
      %s39 = sshll.u32 [#allocation5], 4
      %s40 = int_to_ptr.vmem [resolvable:$true] %s39
      %42 = dma.vmem_to_hbm [thread:$0]  %s40, 256, %s1, [#allocation4]
    $region13: #{tpu_custom_call.1} parent=1 // pred_fallthru
      _
    // Predicated region
    $region14: #{tpu_custom_call.1} parent=1 // pred_check
      _
    $region15: #{tpu_custom_call.1} parent=1 // pred_check_branch
      %44 = sbr.rel (0) target = $region17
    $region16: #{tpu_custom_call.1} parent=1 // pred_region
      %45 = dma.done [#allocation4], 256
    $region17: #{tpu_custom_call.1} parent=1 // pred_fallthru
      _
    %46 = vsyncpa [#allocation3], 1
    %47 = vsyncpa [#allocation4], 1

</llo_original>
